<compile_context>
chip_gen: v7x
topology: tpu7x:2x2x1
jax: 0.10.0
libtpu: 0.0.40
codegen_flags: <defaults>
</compile_context>

<pallas_src>
import jax
import jax.numpy as jnp
from jax.experimental import pallas as pl
from jax.experimental.pallas import tpu as pltpu

# ---------------- config (small synthetic sizes) ----------------
BATCH = 2
UNMAPPED_DIM = 64          # cfg.unmapped_dim
MAP_DIM = 32               # cfg.map_dim
ADAPTER_REDUCTION = 4      # Adapter(map_dim, 4)
NUM_CLASSES = 4            # cfg.num_classes
RATIO = 0.2                # cfg.ratio
SCALE = 30.0               # cfg.scale
EPS = 1e-12                # F.normalize eps

LANE = 128                 # TPU lane width; all packed blocks are 128-wide

# slab row offsets (all multiples of 8 so static slices stay tile-aligned)
_OFF_W_PROJ = 0            # (128,128)  [W_im ; W_tm]  block-stacked along K
_OFF_W_A1 = 128            # (128,128)  [W_ia1 | W_ta1] concat along N
_OFF_W_A2 = 256            # (128,128)  [W_ia2 ; W_ta2] block-stacked along K
_OFF_W_PO = 384            # (128,128)  pre_output weight
_OFF_W_CLS = 512           # (128,128)  normalize(W_cls).T  (pre-computed)
_OFF_BIAS1 = 640           # (8,128)    per-row projection bias (img rows / txt rows)
_OFF_MASK = 648            # (8,128)    adapter-hidden row mask
_OFF_B_PO = 656            # (8,128)    pre_output bias (row 0)
_SLAB_ROWS = 664


def _l2norm(x):
    n = jnp.sqrt(jnp.sum(x * x, axis=-1, keepdims=True))
    return x / jnp.maximum(n, EPS)


# ------------------------------ kernel ------------------------------
def memeclip_kernel(x_ref, slab_ref, out_ref):
    B = BATCH
    x = x_ref[...]                                             # (2B, 128)

    w_proj = slab_ref[_OFF_W_PROJ:_OFF_W_PROJ + LANE, :]
    w_a1 = slab_ref[_OFF_W_A1:_OFF_W_A1 + LANE, :]
    w_a2 = slab_ref[_OFF_W_A2:_OFF_W_A2 + LANE, :]
    w_po = slab_ref[_OFF_W_PO:_OFF_W_PO + LANE, :]
    w_cls = slab_ref[_OFF_W_CLS:_OFF_W_CLS + LANE, :]
    bias1 = slab_ref[_OFF_BIAS1:_OFF_BIAS1 + 2 * B, :]         # (2B, 128)
    mask = slab_ref[_OFF_MASK:_OFF_MASK + 2 * B, :]            # (2B, 128)
    b_po = slab_ref[_OFF_B_PO:_OFF_B_PO + 1, :]                # (1, 128)

    def rnorm(v):
        # x / max(||x||, eps)  ==  x * rsqrt(max(||x||^2, eps^2))  (EUP rsqrt)
        ss = jnp.sum(v * v, axis=-1, keepdims=True)
        return v * jax.lax.rsqrt(jnp.maximum(ss, EPS * EPS))

    # ---- LinearProjection, both paths in one matmul (dropout = identity) ----
    proj = jnp.dot(x, w_proj, preferred_element_type=jnp.float32) + bias1

    # ---- Adapter: Linear(no bias) -> ReLU -> Linear(no bias) -> ReLU ----
    # fc1 computes both paths' hidden units for every row; the row mask keeps
    # only the correct path's hidden block, so fc2 (block-stacked) is exact.
    h = jnp.maximum(jnp.dot(proj, w_a1, preferred_element_type=jnp.float32),
                    0.0) * mask
    adapt = jnp.maximum(jnp.dot(h, w_a2, preferred_element_type=jnp.float32),
                        0.0)

    # ---- residual mixing + L2 normalize (per row) ----
    z = RATIO * adapt + (1.0 - RATIO) * proj
    zn = rnorm(z)

    # ---- multiplicative fusion: img rows (0:B) * txt rows (B:2B) ----
    fused = zn[:B, :] * zn[B:, :]                              # (B, 128)

    # ---- pre_output: Dropout(id) -> Linear -> ReLU -> Dropout(id) ----
    feat = jnp.maximum(
        jnp.dot(fused, w_po, preferred_element_type=jnp.float32) + b_po, 0.0)

    # ---- CosineClassifier: scale * normalize(x) @ normalize(W).T ----
    # (W already normalized + transposed on the host)
    out_ref[...] = SCALE * jnp.dot(rnorm(feat), w_cls,
                                   preferred_element_type=jnp.float32)


# ------------------------------ wrapper ------------------------------
@jax.jit
def memeclip_forward(image_features, text_features, slab):
    B, d_in = image_features.shape

    # pack both modalities into one lane-dense block:
    #   rows 0:B  = [img | 0],  rows B:2B = [0 | txt]
    x2 = jnp.zeros((2 * B, LANE), jnp.float32)
    x2 = x2.at[:B, :d_in].set(image_features)
    x2 = x2.at[B:, d_in:2 * d_in].set(text_features)

    logits_padded = pl.pallas_call(
        memeclip_kernel,
        out_shape=jax.ShapeDtypeStruct((B, LANE), jnp.float32),
        in_specs=[
            pl.BlockSpec(memory_space=pltpu.MemorySpace.VMEM),   # packed inputs
            pl.BlockSpec(memory_space=pltpu.MemorySpace.VMEM),   # parameter slab
        ],
        out_specs=pl.BlockSpec(memory_space=pltpu.MemorySpace.VMEM),
    )(x2, slab)
    return logits_padded[:, :NUM_CLASSES]


# ------------------------------ params ------------------------------
def init_params(key):
    d_in, d_map, n_cls = UNMAPPED_DIM, MAP_DIM, NUM_CLASSES
    d_hid = d_map // ADAPTER_REDUCTION
    ks = jax.random.split(key, 9)
    s = 0.05
    w_im = s * jax.random.normal(ks[0], (d_in, d_map), jnp.float32)
    b_im = s * jax.random.normal(ks[1], (1, d_map), jnp.float32)
    w_tm = s * jax.random.normal(ks[2], (d_in, d_map), jnp.float32)
    b_tm = s * jax.random.normal(ks[3], (1, d_map), jnp.float32)
    w_ia1 = s * jax.random.normal(ks[4], (d_map, d_hid), jnp.float32)
    w_ia2 = s * jax.random.normal(ks[5], (d_hid, d_map), jnp.float32)
    w_ta1 = s * jax.random.normal(ks[6], (d_map, d_hid), jnp.float32)
    w_ta2 = s * jax.random.normal(ks[7], (d_hid, d_map), jnp.float32)
    kk = jax.random.split(ks[8], 3)
    w_po = s * jax.random.normal(kk[0], (d_map, d_map), jnp.float32)
    b_po = s * jax.random.normal(kk[1], (1, d_map), jnp.float32)
    w_cls = s * jax.random.normal(kk[2], (n_cls, d_map), jnp.float32)
    return (w_im, b_im, w_tm, b_tm,
            w_ia1, w_ia2, w_ta1, w_ta2,
            w_po, b_po, w_cls)


def pack_params(params):
    """Pack all parameters into one (664, 128) f32 slab.

    Every tensor is zero-padded to 128 lanes and an 8-row-aligned row range,
    so in-kernel static slices land on (8,128) tile boundaries and the zero
    padding contributes exactly nothing to any matmul.
    """
    (w_im, b_im, w_tm, b_tm,
     w_ia1, w_ia2, w_ta1, w_ta2,
     w_po, b_po, w_cls) = params
    d_map = MAP_DIM
    d_hid = d_map // ADAPTER_REDUCTION
    B = BATCH

    def pad2(a, rows, cols=LANE):
        out = jnp.zeros((rows, cols), jnp.float32)
        return out.at[:a.shape[0], :a.shape[1]].set(a)

    # projection: rows 0:d_in = W_im, rows d_in:2*d_in = W_tm (matches x2 cols)
    w_proj = pad2(jnp.concatenate([w_im, w_tm], axis=0), LANE)
    # adapter fc1: [W_ia1 | W_ta1]  (both paths' hidden units side by side)
    w_a1 = pad2(jnp.concatenate([w_ia1, w_ta1], axis=1), LANE)
    # adapter fc2: [[W_ia2],[W_ta2]] block-stacked along the contraction dim
    w_a2 = pad2(jnp.concatenate([w_ia2, w_ta2], axis=0), LANE)
    w_po_p = pad2(w_po, LANE)
    # classifier: L2-normalize rows then transpose -> (d_map, n_cls), padded
    w_cls_p = pad2(_l2norm(w_cls).T, LANE)

    # per-row projection bias: img rows get b_im, txt rows get b_tm
    bias1 = pad2(jnp.concatenate([jnp.broadcast_to(b_im, (B, d_map)),
                                  jnp.broadcast_to(b_tm, (B, d_map))], axis=0), 8)
    # adapter-hidden row mask: img rows keep cols 0:d_hid, txt rows d_hid:2*d_hid
    mask = jnp.zeros((2 * B, LANE), jnp.float32)
    mask = mask.at[:B, :d_hid].set(1.0).at[B:, d_hid:2 * d_hid].set(1.0)
    mask = pad2(mask, 8)
    b_po_p = pad2(b_po, 8)

    slab = jnp.concatenate([w_proj, w_a1, w_a2, w_po_p, w_cls_p,
                            bias1, mask, b_po_p], axis=0)
    assert slab.shape == (_SLAB_ROWS, LANE)
    return slab


def reference_forward(image_features, text_features, params):
    # pure-JAX reference for sanity checking (matches the PyTorch module)
    (w_im, b_im, w_tm, b_tm,
     w_ia1, w_ia2, w_ta1, w_ta2,
     w_po, b_po, w_cls) = params
    ip = image_features @ w_im + b_im
    tp = text_features @ w_tm + b_tm
    ia = jnp.maximum(jnp.maximum(ip @ w_ia1, 0) @ w_ia2, 0)
    ta = jnp.maximum(jnp.maximum(tp @ w_ta1, 0) @ w_ta2, 0)
    imf = _l2norm(RATIO * ia + (1 - RATIO) * ip)
    txf = _l2norm(RATIO * ta + (1 - RATIO) * tp)
    fused = imf * txf
    feat = jnp.maximum(fused @ w_po + b_po, 0)
    return SCALE * _l2norm(feat) @ _l2norm(w_cls).T


if __name__ == "__main__":
    key = jax.random.PRNGKey(0)
    k_img, k_txt, k_par = jax.random.split(key, 3)
    image_features = jax.random.normal(k_img, (BATCH, UNMAPPED_DIM), jnp.float32)
    text_features = jax.random.normal(k_txt, (BATCH, UNMAPPED_DIM), jnp.float32)
    params = init_params(k_par)
    slab = pack_params(params)

    logits = memeclip_forward(image_features, text_features, slab)
    logits = jax.block_until_ready(logits)

    ref = reference_forward(image_features, text_features, params)
    assert logits.shape == (BATCH, NUM_CLASSES)
    assert jnp.allclose(logits, ref, atol=1e-4, rtol=1e-4)
    print("KERNEL_OK")
</pallas_src>

<mosaic_0001>
module attributes {stable_mosaic.version = 11 : i64} {
  func.func @memeclip_kernel(%arg0: memref<4x128xf32, #tpu.memory_space<vmem>>, %arg1: memref<664x128xf32, #tpu.memory_space<vmem>>, %arg2: memref<2x128xf32, #tpu.memory_space<vmem>>) attributes {dimension_semantics = [], scalar_prefetch = 0 : i64, scratch_operands = 0 : i64, tpu.core_type = #tpu.core_type<tc>} {
    %c0 = arith.constant 0 : index
    %c0_0 = arith.constant 0 : index
    %0 = vector.load %arg0[%c0, %c0_0] : memref<4x128xf32, #tpu.memory_space<vmem>>, vector<4x128xf32>
    %c0_1 = arith.constant 0 : index
    %c0_2 = arith.constant 0 : index
    %1 = vector.load %arg1[%c0_1, %c0_2] : memref<664x128xf32, #tpu.memory_space<vmem>>, vector<128x128xf32>
    %c128 = arith.constant 128 : index
    %c0_3 = arith.constant 0 : index
    %2 = vector.load %arg1[%c128, %c0_3] : memref<664x128xf32, #tpu.memory_space<vmem>>, vector<128x128xf32>
    %c256 = arith.constant 256 : index
    %c0_4 = arith.constant 0 : index
    %3 = vector.load %arg1[%c256, %c0_4] : memref<664x128xf32, #tpu.memory_space<vmem>>, vector<128x128xf32>
    %c384 = arith.constant 384 : index
    %c0_5 = arith.constant 0 : index
    %4 = vector.load %arg1[%c384, %c0_5] : memref<664x128xf32, #tpu.memory_space<vmem>>, vector<128x128xf32>
    %c512 = arith.constant 512 : index
    %c0_6 = arith.constant 0 : index
    %5 = vector.load %arg1[%c512, %c0_6] : memref<664x128xf32, #tpu.memory_space<vmem>>, vector<128x128xf32>
    %c640 = arith.constant 640 : index
    %c0_7 = arith.constant 0 : index
    %6 = vector.load %arg1[%c640, %c0_7] : memref<664x128xf32, #tpu.memory_space<vmem>>, vector<4x128xf32>
    %c648 = arith.constant 648 : index
    %c0_8 = arith.constant 0 : index
    %7 = vector.load %arg1[%c648, %c0_8] : memref<664x128xf32, #tpu.memory_space<vmem>>, vector<4x128xf32>
    %c656 = arith.constant 656 : index
    %c0_9 = arith.constant 0 : index
    %8 = vector.load %arg1[%c656, %c0_9] : memref<664x128xf32, #tpu.memory_space<vmem>>, vector<1x128xf32>
    %cst = arith.constant dense<0.000000e+00> : vector<4x128xf32>
    %9 = tpu.matmul %0, %1, %cst {dimension_numbers = #tpu.dot_dimension_numbers<[1], [0], [0], [1], [0, 0, 1, 1], [], []>} : vector<4x128xf32>, vector<128x128xf32>, vector<4x128xf32> -> vector<4x128xf32>
    %10 = arith.addf %9, %6 : vector<4x128xf32>
    %cst_10 = arith.constant dense<0.000000e+00> : vector<4x128xf32>
    %11 = tpu.matmul %10, %2, %cst_10 {dimension_numbers = #tpu.dot_dimension_numbers<[1], [0], [0], [1], [0, 0, 1, 1], [], []>} : vector<4x128xf32>, vector<128x128xf32>, vector<4x128xf32> -> vector<4x128xf32>
    %cst_11 = arith.constant 0.000000e+00 : f32
    %12 = vector.broadcast %cst_11 : f32 to vector<4x128xf32>
    %13 = arith.maximumf %11, %12 : vector<4x128xf32>
    %14 = arith.mulf %13, %7 : vector<4x128xf32>
    %cst_12 = arith.constant dense<0.000000e+00> : vector<4x128xf32>
    %15 = tpu.matmul %14, %3, %cst_12 {dimension_numbers = #tpu.dot_dimension_numbers<[1], [0], [0], [1], [0, 0, 1, 1], [], []>} : vector<4x128xf32>, vector<128x128xf32>, vector<4x128xf32> -> vector<4x128xf32>
    %cst_13 = arith.constant 0.000000e+00 : f32
    %16 = vector.broadcast %cst_13 : f32 to vector<4x128xf32>
    %17 = arith.maximumf %15, %16 : vector<4x128xf32>
    %cst_14 = arith.constant 2.000000e-01 : f32
    %18 = vector.broadcast %cst_14 : f32 to vector<4x128xf32>
    %19 = arith.mulf %18, %17 : vector<4x128xf32>
    %cst_15 = arith.constant 8.000000e-01 : f32
    %20 = vector.broadcast %cst_15 : f32 to vector<4x128xf32>
    %21 = arith.mulf %20, %10 : vector<4x128xf32>
    %22 = arith.addf %19, %21 : vector<4x128xf32>
    %23 = arith.mulf %22, %22 : vector<4x128xf32>
    %cst_16 = arith.constant dense<0.000000e+00> : vector<4xf32>
    %24 = vector.multi_reduction <add>, %23, %cst_16 [1] : vector<4x128xf32> to vector<4xf32>
    %25 = vector.shape_cast %24 : vector<4xf32> to vector<4x1xf32>
    %cst_17 = arith.constant 1.000000e-24 : f32
    %26 = vector.broadcast %cst_17 : f32 to vector<4x1xf32>
    %27 = arith.maximumf %25, %26 : vector<4x1xf32>
    %28 = math.rsqrt %27 : vector<4x1xf32>
    %29 = vector.broadcast %28 : vector<4x1xf32> to vector<4x128xf32>
    %30 = arith.mulf %22, %29 : vector<4x128xf32>
    %31 = vector.extract_strided_slice %30 {offsets = [0, 0], sizes = [2, 128], strides = [1, 1]} : vector<4x128xf32> to vector<2x128xf32>
    %32 = vector.extract_strided_slice %30 {offsets = [2, 0], sizes = [2, 128], strides = [1, 1]} : vector<4x128xf32> to vector<2x128xf32>
    %33 = arith.mulf %31, %32 : vector<2x128xf32>
    %cst_18 = arith.constant dense<0.000000e+00> : vector<2x128xf32>
    %34 = tpu.matmul %33, %4, %cst_18 {dimension_numbers = #tpu.dot_dimension_numbers<[1], [0], [0], [1], [0, 0, 1, 1], [], []>} : vector<2x128xf32>, vector<128x128xf32>, vector<2x128xf32> -> vector<2x128xf32>
    %35 = vector.broadcast %8 : vector<1x128xf32> to vector<2x128xf32>
    %36 = arith.addf %34, %35 : vector<2x128xf32>
    %cst_19 = arith.constant 0.000000e+00 : f32
    %37 = vector.broadcast %cst_19 : f32 to vector<2x128xf32>
    %38 = arith.maximumf %36, %37 : vector<2x128xf32>
    %39 = arith.mulf %38, %38 : vector<2x128xf32>
    %cst_20 = arith.constant dense<0.000000e+00> : vector<2xf32>
    %40 = vector.multi_reduction <add>, %39, %cst_20 [1] : vector<2x128xf32> to vector<2xf32>
    %41 = vector.shape_cast %40 : vector<2xf32> to vector<2x1xf32>
    %cst_21 = arith.constant 1.000000e-24 : f32
    %42 = vector.broadcast %cst_21 : f32 to vector<2x1xf32>
    %43 = arith.maximumf %41, %42 : vector<2x1xf32>
    %44 = math.rsqrt %43 : vector<2x1xf32>
    %45 = vector.broadcast %44 : vector<2x1xf32> to vector<2x128xf32>
    %46 = arith.mulf %38, %45 : vector<2x128xf32>
    %cst_22 = arith.constant dense<0.000000e+00> : vector<2x128xf32>
    %47 = tpu.matmul %46, %5, %cst_22 {dimension_numbers = #tpu.dot_dimension_numbers<[1], [0], [0], [1], [0, 0, 1, 1], [], []>} : vector<2x128xf32>, vector<128x128xf32>, vector<2x128xf32> -> vector<2x128xf32>
    %cst_23 = arith.constant 3.000000e+01 : f32
    %48 = vector.broadcast %cst_23 : f32 to vector<2x128xf32>
    %49 = arith.mulf %48, %47 : vector<2x128xf32>
    %c0_24 = arith.constant 0 : index
    %c0_25 = arith.constant 0 : index
    %50 = vector.load %arg2[%c0_24, %c0_25] : memref<2x128xf32, #tpu.memory_space<vmem>>, vector<2x128xf32>
    tpu.vector_store %arg2[%c0_24, %c0_25], %49 {strides = array<i32>} : memref<2x128xf32, #tpu.memory_space<vmem>>, vector<2x128xf32>,
    return
  }
}

</mosaic_0001>

<llo_original>
// kernel: memeclip_forward.1
$region0: #{memeclip_forward.1}
  #allocation0 [shape = 'u32[]', space=smem, size = 0x4, offset = 0x4, fixed_abs, tag = 'smem constant byte address 0x4 - core index']
  #allocation1 [shape = 'u32[144,128]{1,0:T(1,128)}', space=vmem, size = 0x12000, scoped, tag = 'internal scratch']
  %s0 = inlined_call_operand.vmem [shape: f32[4,128], index: 0, kind: input, shape index: {}]
  %s1 = inlined_call_operand.hbm [shape: f32[664,128], index: 1, kind: input, shape index: {}]
  %s2 = inlined_call_operand.hbm [shape: f32[2,128], index: 2, kind: output, shape index: {}]
  %s3 = sld [smem:[#allocation0]]
  $region22: #{memeclip_forward.1} parent=0
    _
  %s5 = ssub.s32 1, %s3
  %s6 = scalar_select 0, %s5, %s3
  $region1: #{memeclip_forward.1} parent=0
    #allocation2 [shape = 'u8[339968]{0}', space=vmem, size = 0x53000, scoped, tag = 'input window, operand 1, single buffered']
    #allocation3 [shape = 's32[1]{0}', space=sflag, size = 0x4, scoped, tag = 'scoped memory for memeclip_forward.1']
    #allocation4 [shape = 's32[1]{0}', space=sflag, size = 0x4, scoped, tag = 'scoped memory for memeclip_forward.1']
    #allocation5 [shape = 'u8[1024]{0}', space=vmem, size = 0x400, scoped, tag = 'output window, operand 0, single buffered']
    %7 = vsyncpa [#allocation3], 0
    %8 = vsyncpa [#allocation4], 0
    // Predicated region
    $region2: #{memeclip_forward.1} parent=1 // pred_check
      _
    $region3: #{memeclip_forward.1} parent=1 // pred_check_branch
      %10 = sbr.rel (0) target = $region5
    $region4: #{memeclip_forward.1} parent=1 // pred_region
      _
    $region5: #{memeclip_forward.1} parent=1 // pred_fallthru
      _
    // Predicated region
    $region6: #{memeclip_forward.1} parent=1 // pred_check
      _
    $region7: #{memeclip_forward.1} parent=1 // pred_check_branch
      %12 = sbr.rel (0) target = $region9
    $region8: #{memeclip_forward.1} parent=1 // pred_region
      %s14 = ssub.s32 10624, 10624
      %15 = vsyncadd [#allocation3], %s14
      %s16 = sshll.u32 [#allocation2], 4
      %s17 = int_to_ptr.vmem [resolvable:$true] %s16
      %22 = dma.hbm_to_vmem [thread:$0]  %s1, 10624, %s17, [#allocation3], 128, 128, 8
    $region9: #{memeclip_forward.1} parent=1 // pred_fallthru
      _
    // Predicated region
    $region10: #{memeclip_forward.1} parent=1 // pred_check
      _
    $region11: #{memeclip_forward.1} parent=1 // pred_check_branch
      %24 = sbr.rel (0) target = $region13
    $region12: #{memeclip_forward.1} parent=1 // pred_region
      %25 = dma.done [#allocation3], 10624
    $region13: #{memeclip_forward.1} parent=1 // pred_fallthru
      _
    %v26 = vld [vmem:[%s0] sm:$0xf]
    %v27 = vld [vmem:[#allocation2] sm:$0xff]
    %v28 = vld [vmem:[#allocation2 + $0x8] sm:$0xff]
    %v29 = vld [vmem:[#allocation2 + $0x10] sm:$0xff]
    %v30 = vld [vmem:[#allocation2 + $0x18] sm:$0xff]
    %v31 = vld [vmem:[#allocation2 + $0x20] sm:$0xff]
    %v32 = vld [vmem:[#allocation2 + $0x28] sm:$0xff]
    %v33 = vld [vmem:[#allocation2 + $0x30] sm:$0xff]
    %v34 = vld [vmem:[#allocation2 + $0x38] sm:$0xff]
    %v35 = vld [vmem:[#allocation2 + $0x40] sm:$0xff]
    %v36 = vld [vmem:[#allocation2 + $0x48] sm:$0xff]
    %v37 = vld [vmem:[#allocation2 + $0x50] sm:$0xff]
    %v38 = vld [vmem:[#allocation2 + $0x58] sm:$0xff]
    %v39 = vld [vmem:[#allocation2 + $0x60] sm:$0xff]
    %v40 = vld [vmem:[#allocation2 + $0x68] sm:$0xff]
    %v41 = vld [vmem:[#allocation2 + $0x70] sm:$0xff]
    %v42 = vld [vmem:[#allocation2 + $0x78] sm:$0xff]
    %v43 = vld [vmem:[#allocation2 + $0x80] sm:$0xff]
    %v44 = vld [vmem:[#allocation2 + $0x88] sm:$0xff]
    %v45 = vld [vmem:[#allocation2 + $0x90] sm:$0xff]
    %v46 = vld [vmem:[#allocation2 + $0x98] sm:$0xff]
    %v47 = vld [vmem:[#allocation2 + $0xa0] sm:$0xff]
    %v48 = vld [vmem:[#allocation2 + $0xa8] sm:$0xff]
    %v49 = vld [vmem:[#allocation2 + $0xb0] sm:$0xff]
    %v50 = vld [vmem:[#allocation2 + $0xb8] sm:$0xff]
    %v51 = vld [vmem:[#allocation2 + $0xc0] sm:$0xff]
    %v52 = vld [vmem:[#allocation2 + $0xc8] sm:$0xff]
    %v53 = vld [vmem:[#allocation2 + $0xd0] sm:$0xff]
    %v54 = vld [vmem:[#allocation2 + $0xd8] sm:$0xff]
    %v55 = vld [vmem:[#allocation2 + $0xe0] sm:$0xff]
    %v56 = vld [vmem:[#allocation2 + $0xe8] sm:$0xff]
    %v57 = vld [vmem:[#allocation2 + $0xf0] sm:$0xff]
    %v58 = vld [vmem:[#allocation2 + $0xf8] sm:$0xff]
    %v59 = vld [vmem:[#allocation2 + $0x100] sm:$0xff]
    %v60 = vld [vmem:[#allocation2 + $0x108] sm:$0xff]
    %v61 = vld [vmem:[#allocation2 + $0x110] sm:$0xff]
    %v62 = vld [vmem:[#allocation2 + $0x118] sm:$0xff]
    %v63 = vld [vmem:[#allocation2 + $0x120] sm:$0xff]
    %v64 = vld [vmem:[#allocation2 + $0x128] sm:$0xff]
    %v65 = vld [vmem:[#allocation2 + $0x130] sm:$0xff]
    %v66 = vld [vmem:[#allocation2 + $0x138] sm:$0xff]
    %v67 = vld [vmem:[#allocation2 + $0x140] sm:$0xff]
    %v68 = vld [vmem:[#allocation2 + $0x148] sm:$0xff]
    %v69 = vld [vmem:[#allocation2 + $0x150] sm:$0xff]
    %v70 = vld [vmem:[#allocation2 + $0x158] sm:$0xff]
    %v71 = vld [vmem:[#allocation2 + $0x160] sm:$0xff]
    %v72 = vld [vmem:[#allocation2 + $0x168] sm:$0xff]
    %v73 = vld [vmem:[#allocation2 + $0x170] sm:$0xff]
    %v74 = vld [vmem:[#allocation2 + $0x178] sm:$0xff]
    %v75 = vld [vmem:[#allocation2 + $0x180] sm:$0xff]
    %v76 = vld [vmem:[#allocation2 + $0x188] sm:$0xff]
    %v77 = vld [vmem:[#allocation2 + $0x190] sm:$0xff]
    %v78 = vld [vmem:[#allocation2 + $0x198] sm:$0xff]
    %v79 = vld [vmem:[#allocation2 + $0x1a0] sm:$0xff]
    %v80 = vld [vmem:[#allocation2 + $0x1a8] sm:$0xff]
    %v81 = vld [vmem:[#allocation2 + $0x1b0] sm:$0xff]
    %v82 = vld [vmem:[#allocation2 + $0x1b8] sm:$0xff]
    %v83 = vld [vmem:[#allocation2 + $0x1c0] sm:$0xff]
    %v84 = vld [vmem:[#allocation2 + $0x1c8] sm:$0xff]
    %v85 = vld [vmem:[#allocation2 + $0x1d0] sm:$0xff]
    %v86 = vld [vmem:[#allocation2 + $0x1d8] sm:$0xff]
    %v87 = vld [vmem:[#allocation2 + $0x1e0] sm:$0xff]
    %v88 = vld [vmem:[#allocation2 + $0x1e8] sm:$0xff]
    %v89 = vld [vmem:[#allocation2 + $0x1f0] sm:$0xff]
    %v90 = vld [vmem:[#allocation2 + $0x1f8] sm:$0xff]
    %v91 = vld [vmem:[#allocation2 + $0x200] sm:$0xff]
    %v92 = vld [vmem:[#allocation2 + $0x208] sm:$0xff]
    %v93 = vld [vmem:[#allocation2 + $0x210] sm:$0xff]
    %v94 = vld [vmem:[#allocation2 + $0x218] sm:$0xff]
    %v95 = vld [vmem:[#allocation2 + $0x220] sm:$0xff]
    %v96 = vld [vmem:[#allocation2 + $0x228] sm:$0xff]
    %v97 = vld [vmem:[#allocation2 + $0x230] sm:$0xff]
    %v98 = vld [vmem:[#allocation2 + $0x238] sm:$0xff]
    %v99 = vld [vmem:[#allocation2 + $0x240] sm:$0xff]
    %v100 = vld [vmem:[#allocation2 + $0x248] sm:$0xff]
    %v101 = vld [vmem:[#allocation2 + $0x250] sm:$0xff]
    %v102 = vld [vmem:[#allocation2 + $0x258] sm:$0xff]
    %v103 = vld [vmem:[#allocation2 + $0x260] sm:$0xff]
    %v104 = vld [vmem:[#allocation2 + $0x268] sm:$0xff]
    %v105 = vld [vmem:[#allocation2 + $0x270] sm:$0xff]
    %v106 = vld [vmem:[#allocation2 + $0x278] sm:$0xff]
    %v107 = vld [vmem:[#allocation2 + $0x280] sm:$0xf]
    %v108 = vld [vmem:[#allocation2 + $0x288] sm:$0xf]
    %v109 = vld [vmem:[#allocation2 + $0x290] sm:$0x1]
    %110 = vmatprep.subr.mxu0 0.0
    %111 = vmatpush1.msra.mxu0 %v27
    %112 = vmatprep.subr.mxu0 0.0
    %113 = vmatpush1.msra.mxu0 %v28
    %114 = vmatprep.subr.mxu0 0.0
    %115 = vmatpush1.msra.mxu0 %v29
    %116 = vmatprep.subr.mxu0 0.0
    %117 = vmatpush1.msra.mxu0 %v30
    %118 = vmatprep.subr.mxu0 0.0
    %119 = vmatpush1.msra.mxu0 %v31
    %120 = vmatprep.subr.mxu0 0.0
    %121 = vmatpush1.msra.mxu0 %v32
    %122 = vmatprep.subr.mxu0 0.0
    %123 = vmatpush1.msra.mxu0 %v33
    %124 = vmatprep.subr.mxu0 0.0
    %125 = vmatpush1.msra.mxu0 %v34
    %126 = vmatprep.subr.mxu0 0.0
    %127 = vmatpush1.msra.mxu0 %v35
    %128 = vmatprep.subr.mxu0 0.0
    %129 = vmatpush1.msra.mxu0 %v36
    %130 = vmatprep.subr.mxu0 0.0
    %131 = vmatpush1.msra.mxu0 %v37
    %132 = vmatprep.subr.mxu0 0.0
    %133 = vmatpush1.msra.mxu0 %v38
    %134 = vmatprep.subr.mxu0 0.0
    %135 = vmatpush1.msra.mxu0 %v39
    %136 = vmatprep.subr.mxu0 0.0
    %137 = vmatpush1.msra.mxu0 %v40
    %138 = vmatprep.subr.mxu0 0.0
    %139 = vmatpush1.msra.mxu0 %v41
    %140 = vmatprep.subr.mxu0 0.0
    %141 = vmatpush1.msra.mxu0 %v42
    %142 = vmatprep.subr.mxu0 0.0
    %143 = vmatpush1.msra.mxu0 0.0
    %144 = vmatprep.subr.mxu0 0.0
    %145 = vmatpush1.msra.mxu0 0.0
    %146 = vmatprep.subr.mxu0 0.0
    %147 = vmatpush1.msra.mxu0 0.0
    %148 = vmatprep.subr.mxu0 0.0
    %149 = vmatpush1.msra.mxu0 0.0
    %150 = vmatprep.subr.mxu0 0.0
    %151 = vmatpush1.msra.mxu0 0.0
    %152 = vmatprep.subr.mxu0 0.0
    %153 = vmatpush1.msra.mxu0 0.0
    %154 = vmatprep.subr.mxu0 0.0
    %155 = vmatpush1.msra.mxu0 0.0
    %156 = vmatprep.subr.mxu0 0.0
    %157 = vmatpush1.msra.mxu0 0.0
    %158 = vmatprep.subr.mxu0 0.0
    %159 = vmatpush1.msra.mxu0 0.0
    %160 = vmatprep.subr.mxu0 0.0
    %161 = vmatpush1.msra.mxu0 0.0
    %162 = vmatprep.subr.mxu0 0.0
    %163 = vmatpush1.msra.mxu0 0.0
    %164 = vmatprep.subr.mxu0 0.0
    %165 = vmatpush1.msra.mxu0 0.0
    %166 = vmatprep.subr.mxu0 0.0
    %167 = vmatpush1.msra.mxu0 0.0
    %168 = vmatprep.subr.mxu0 0.0
    %169 = vmatpush1.msra.mxu0 0.0
    %170 = vmatprep.subr.mxu0 0.0
    %171 = vmatpush1.msra.mxu0 0.0
    %172 = vmatprep.subr.mxu0 0.0
    %173 = vmatpush1.msra.mxu0 0.0
    %174 = vmatprep.mubr.f32.mxu0 0.0
    %175 = vmatmul.mubr.f32.gmra.mrb[0].mxu0 %v26
    %v176 = vpop.f32.mrb[0].mxu0
    %v177 = vadd.f32 %v107, %v176
    %v178 = vpop.f32.mrb[0].mxu0
    %179 = vdwg.mxu0
    %180 = vmatprep.subr.mxu0 0.0
    %181 = vmatpush1.msra.mxu0 %v43
    %182 = vmatprep.subr.mxu0 0.0
    %183 = vmatpush1.msra.mxu0 %v44
    %184 = vmatprep.subr.mxu0 0.0
    %185 = vmatpush1.msra.mxu0 %v45
    %186 = vmatprep.subr.mxu0 0.0
    %187 = vmatpush1.msra.mxu0 %v46
    %188 = vmatprep.subr.mxu0 0.0
    %189 = vmatpush1.msra.mxu0 %v47
    %190 = vmatprep.subr.mxu0 0.0
    %191 = vmatpush1.msra.mxu0 %v48
    %192 = vmatprep.subr.mxu0 0.0
    %193 = vmatpush1.msra.mxu0 %v49
    %194 = vmatprep.subr.mxu0 0.0
    %195 = vmatpush1.msra.mxu0 %v50
    %196 = vmatprep.subr.mxu0 0.0
    %197 = vmatpush1.msra.mxu0 %v51
    %198 = vmatprep.subr.mxu0 0.0
    %199 = vmatpush1.msra.mxu0 %v52
    %200 = vmatprep.subr.mxu0 0.0
    %201 = vmatpush1.msra.mxu0 %v53
    %202 = vmatprep.subr.mxu0 0.0
    %203 = vmatpush1.msra.mxu0 %v54
    %204 = vmatprep.subr.mxu0 0.0
    %205 = vmatpush1.msra.mxu0 %v55
    %206 = vmatprep.subr.mxu0 0.0
    %207 = vmatpush1.msra.mxu0 %v56
    %208 = vmatprep.subr.mxu0 0.0
    %209 = vmatpush1.msra.mxu0 %v57
    %210 = vmatprep.subr.mxu0 0.0
    %211 = vmatpush1.msra.mxu0 %v58
    %212 = vmatprep.subr.mxu0 0.0
    %213 = vmatpush1.msra.mxu0 0.0
    %214 = vmatprep.subr.mxu0 0.0
    %215 = vmatpush1.msra.mxu0 0.0
    %216 = vmatprep.subr.mxu0 0.0
    %217 = vmatpush1.msra.mxu0 0.0
    %218 = vmatprep.subr.mxu0 0.0
    %219 = vmatpush1.msra.mxu0 0.0
    %220 = vmatprep.subr.mxu0 0.0
    %221 = vmatpush1.msra.mxu0 0.0
    %222 = vmatprep.subr.mxu0 0.0
    %223 = vmatpush1.msra.mxu0 0.0
    %224 = vmatprep.subr.mxu0 0.0
    %225 = vmatpush1.msra.mxu0 0.0
    %226 = vmatprep.subr.mxu0 0.0
    %227 = vmatpush1.msra.mxu0 0.0
    %228 = vmatprep.subr.mxu0 0.0
    %229 = vmatpush1.msra.mxu0 0.0
    %230 = vmatprep.subr.mxu0 0.0
    %231 = vmatpush1.msra.mxu0 0.0
    %232 = vmatprep.subr.mxu0 0.0
    %233 = vmatpush1.msra.mxu0 0.0
    %234 = vmatprep.subr.mxu0 0.0
    %235 = vmatpush1.msra.mxu0 0.0
    %236 = vmatprep.subr.mxu0 0.0
    %237 = vmatpush1.msra.mxu0 0.0
    %238 = vmatprep.subr.mxu0 0.0
    %239 = vmatpush1.msra.mxu0 0.0
    %240 = vmatprep.subr.mxu0 0.0
    %241 = vmatpush1.msra.mxu0 0.0
    %242 = vmatprep.subr.mxu0 0.0
    %243 = vmatpush1.msra.mxu0 0.0
    %244 = vmatprep.mubr.f32.mxu0 0.0
    %245 = vmatmul.mubr.f32.gmra.mrb[0].mxu0 %v177
    %v246 = vpop.f32.mrb[0].mxu0
    %v247 = vadd.f32 0.0, %v246
    %v248 = vpop.f32.mrb[0].mxu0
    %249 = vdwg.mxu0
    %v250 = vmax.f32 %v247, 0.0
    %v251 = vmul.f32 %v250, %v108
    %252 = vmatprep.subr.mxu0 0.0
    %253 = vmatpush1.msra.mxu0 %v59
    %254 = vmatprep.subr.mxu0 0.0
    %255 = vmatpush1.msra.mxu0 %v60
    %256 = vmatprep.subr.mxu0 0.0
    %257 = vmatpush1.msra.mxu0 %v61
    %258 = vmatprep.subr.mxu0 0.0
    %259 = vmatpush1.msra.mxu0 %v62
    %260 = vmatprep.subr.mxu0 0.0
    %261 = vmatpush1.msra.mxu0 %v63
    %262 = vmatprep.subr.mxu0 0.0
    %263 = vmatpush1.msra.mxu0 %v64
    %264 = vmatprep.subr.mxu0 0.0
    %265 = vmatpush1.msra.mxu0 %v65
    %266 = vmatprep.subr.mxu0 0.0
    %267 = vmatpush1.msra.mxu0 %v66
    %268 = vmatprep.subr.mxu0 0.0
    %269 = vmatpush1.msra.mxu0 %v67
    %270 = vmatprep.subr.mxu0 0.0
    %271 = vmatpush1.msra.mxu0 %v68
    %272 = vmatprep.subr.mxu0 0.0
    %273 = vmatpush1.msra.mxu0 %v69
    %274 = vmatprep.subr.mxu0 0.0
    %275 = vmatpush1.msra.mxu0 %v70
    %276 = vmatprep.subr.mxu0 0.0
    %277 = vmatpush1.msra.mxu0 %v71
    %278 = vmatprep.subr.mxu0 0.0
    %279 = vmatpush1.msra.mxu0 %v72
    %280 = vmatprep.subr.mxu0 0.0
    %281 = vmatpush1.msra.mxu0 %v73
    %282 = vmatprep.subr.mxu0 0.0
    %283 = vmatpush1.msra.mxu0 %v74
    %284 = vmatprep.subr.mxu0 0.0
    %285 = vmatpush1.msra.mxu0 0.0
    %286 = vmatprep.subr.mxu0 0.0
    %287 = vmatpush1.msra.mxu0 0.0
    %288 = vmatprep.subr.mxu0 0.0
    %289 = vmatpush1.msra.mxu0 0.0
    %290 = vmatprep.subr.mxu0 0.0
    %291 = vmatpush1.msra.mxu0 0.0
    %292 = vmatprep.subr.mxu0 0.0
    %293 = vmatpush1.msra.mxu0 0.0
    %294 = vmatprep.subr.mxu0 0.0
    %295 = vmatpush1.msra.mxu0 0.0
    %296 = vmatprep.subr.mxu0 0.0
    %297 = vmatpush1.msra.mxu0 0.0
    %298 = vmatprep.subr.mxu0 0.0
    %299 = vmatpush1.msra.mxu0 0.0
    %300 = vmatprep.subr.mxu0 0.0
    %301 = vmatpush1.msra.mxu0 0.0
    %302 = vmatprep.subr.mxu0 0.0
    %303 = vmatpush1.msra.mxu0 0.0
    %304 = vmatprep.subr.mxu0 0.0
    %305 = vmatpush1.msra.mxu0 0.0
    %306 = vmatprep.subr.mxu0 0.0
    %307 = vmatpush1.msra.mxu0 0.0
    %308 = vmatprep.subr.mxu0 0.0
    %309 = vmatpush1.msra.mxu0 0.0
    %310 = vmatprep.subr.mxu0 0.0
    %311 = vmatpush1.msra.mxu0 0.0
    %312 = vmatprep.subr.mxu0 0.0
    %313 = vmatpush1.msra.mxu0 0.0
    %314 = vmatprep.subr.mxu0 0.0
    %315 = vmatpush1.msra.mxu0 0.0
    %316 = vmatprep.mubr.f32.mxu0 0.0
    %317 = vmatmul.mubr.f32.gmra.mrb[0].mxu0 %v251
    %v318 = vpop.f32.mrb[0].mxu0
    %v319 = vadd.f32 0.0, %v318
    %v320 = vpop.f32.mrb[0].mxu0
    %321 = vdwg.mxu0
    %v322 = vmax.f32 %v319, 0.0
    %v323 = vmul.f32 %v322, 0.2
    %v324 = vmul.f32 %v177, 0.8
    %v325 = vadd.f32 %v323, %v324
    %v326 = vmul.f32 %v325, %v325
    %vm327 = vcmask 1043456
    %v328 = vsel %vm327, %v326, 0.0
    %329 = vadd.xlane.f32.xlu0 %v328
    %v330 = vpop.xlane.xlu0 %329
    %v331 = vmax.f32 %v330, 1e-24
    %v332 = vrsqrt.pop %v331
    %v333 = vmul.f32 %v325, %v332
    %v335 = vrot.slane %v333, 2
    %v337 = vmul.f32 %v333, %v335
    %v338 = vlaneseq
    %v339 = vshrl.u32 %v338, 7
    %v340 = vsub.s32 0, %v339
    %v341 = vrot.slane %v109, %v340
    %342 = vmatprep.subr.mxu0 0.0
    %343 = vmatpush1.msra.mxu0 %v75
    %344 = vmatprep.subr.mxu0 0.0
    %345 = vmatpush1.msra.mxu0 %v76
    %346 = vmatprep.subr.mxu0 0.0
    %347 = vmatpush1.msra.mxu0 %v77
    %348 = vmatprep.subr.mxu0 0.0
    %349 = vmatpush1.msra.mxu0 %v78
    %350 = vmatprep.subr.mxu0 0.0
    %351 = vmatpush1.msra.mxu0 %v79
    %352 = vmatprep.subr.mxu0 0.0
    %353 = vmatpush1.msra.mxu0 %v80
    %354 = vmatprep.subr.mxu0 0.0
    %355 = vmatpush1.msra.mxu0 %v81
    %356 = vmatprep.subr.mxu0 0.0
    %357 = vmatpush1.msra.mxu0 %v82
    %358 = vmatprep.subr.mxu0 0.0
    %359 = vmatpush1.msra.mxu0 %v83
    %360 = vmatprep.subr.mxu0 0.0
    %361 = vmatpush1.msra.mxu0 %v84
    %362 = vmatprep.subr.mxu0 0.0
    %363 = vmatpush1.msra.mxu0 %v85
    %364 = vmatprep.subr.mxu0 0.0
    %365 = vmatpush1.msra.mxu0 %v86
    %366 = vmatprep.subr.mxu0 0.0
    %367 = vmatpush1.msra.mxu0 %v87
    %368 = vmatprep.subr.mxu0 0.0
    %369 = vmatpush1.msra.mxu0 %v88
    %370 = vmatprep.subr.mxu0 0.0
    %371 = vmatpush1.msra.mxu0 %v89
    %372 = vmatprep.subr.mxu0 0.0
    %373 = vmatpush1.msra.mxu0 %v90
    %374 = vmatprep.subr.mxu0 0.0
    %375 = vmatpush1.msra.mxu0 0.0
    %376 = vmatprep.subr.mxu0 0.0
    %377 = vmatpush1.msra.mxu0 0.0
    %378 = vmatprep.subr.mxu0 0.0
    %379 = vmatpush1.msra.mxu0 0.0
    %380 = vmatprep.subr.mxu0 0.0
    %381 = vmatpush1.msra.mxu0 0.0
    %382 = vmatprep.subr.mxu0 0.0
    %383 = vmatpush1.msra.mxu0 0.0
    %384 = vmatprep.subr.mxu0 0.0
    %385 = vmatpush1.msra.mxu0 0.0
    %386 = vmatprep.subr.mxu0 0.0
    %387 = vmatpush1.msra.mxu0 0.0
    %388 = vmatprep.subr.mxu0 0.0
    %389 = vmatpush1.msra.mxu0 0.0
    %390 = vmatprep.subr.mxu0 0.0
    %391 = vmatpush1.msra.mxu0 0.0
    %392 = vmatprep.subr.mxu0 0.0
    %393 = vmatpush1.msra.mxu0 0.0
    %394 = vmatprep.subr.mxu0 0.0
    %395 = vmatpush1.msra.mxu0 0.0
    %396 = vmatprep.subr.mxu0 0.0
    %397 = vmatpush1.msra.mxu0 0.0
    %398 = vmatprep.subr.mxu0 0.0
    %399 = vmatpush1.msra.mxu0 0.0
    %400 = vmatprep.subr.mxu0 0.0
    %401 = vmatpush1.msra.mxu0 0.0
    %402 = vmatprep.subr.mxu0 0.0
    %403 = vmatpush1.msra.mxu0 0.0
    %404 = vmatprep.subr.mxu0 0.0
    %405 = vmatpush1.msra.mxu0 0.0
    %406 = vmatprep.mubr.f32.mxu0 0.0
    %407 = vmatmul.mubr.f32.gmra.mrb[0].mxu0 %v337
    %v408 = vpop.f32.mrb[0].mxu0
    %v409 = vadd.f32 %v341, %v408
    %v410 = vpop.f32.mrb[0].mxu0
    %411 = vdwg.mxu0
    %v412 = vmax.f32 %v409, 0.0
    %v413 = vmul.f32 %v412, %v412
    %vm414 = vcmask 1041408
    %v415 = vsel %vm414, %v413, 0.0
    %416 = vadd.xlane.f32.xlu0 %v415
    %v417 = vpop.xlane.xlu0 %416
    %v418 = vmax.f32 %v417, 1e-24
    %v419 = vrsqrt.pop %v418
    %v420 = vmul.f32 %v412, %v419
    %421 = vmatprep.subr.mxu0 0.0
    %422 = vmatpush1.msra.mxu0 %v91
    %423 = vmatprep.subr.mxu0 0.0
    %424 = vmatpush1.msra.mxu0 %v92
    %425 = vmatprep.subr.mxu0 0.0
    %426 = vmatpush1.msra.mxu0 %v93
    %427 = vmatprep.subr.mxu0 0.0
    %428 = vmatpush1.msra.mxu0 %v94
    %429 = vmatprep.subr.mxu0 0.0
    %430 = vmatpush1.msra.mxu0 %v95
    %431 = vmatprep.subr.mxu0 0.0
    %432 = vmatpush1.msra.mxu0 %v96
    %433 = vmatprep.subr.mxu0 0.0
    %434 = vmatpush1.msra.mxu0 %v97
    %435 = vmatprep.subr.mxu0 0.0
    %436 = vmatpush1.msra.mxu0 %v98
    %437 = vmatprep.subr.mxu0 0.0
    %438 = vmatpush1.msra.mxu0 %v99
    %439 = vmatprep.subr.mxu0 0.0
    %440 = vmatpush1.msra.mxu0 %v100
    %441 = vmatprep.subr.mxu0 0.0
    %442 = vmatpush1.msra.mxu0 %v101
    %443 = vmatprep.subr.mxu0 0.0
    %444 = vmatpush1.msra.mxu0 %v102
    %445 = vmatprep.subr.mxu0 0.0
    %446 = vmatpush1.msra.mxu0 %v103
    %447 = vmatprep.subr.mxu0 0.0
    %448 = vmatpush1.msra.mxu0 %v104
    %449 = vmatprep.subr.mxu0 0.0
    %450 = vmatpush1.msra.mxu0 %v105
    %451 = vmatprep.subr.mxu0 0.0
    %452 = vmatpush1.msra.mxu0 %v106
    %453 = vmatprep.subr.mxu0 0.0
    %454 = vmatpush1.msra.mxu0 0.0
    %455 = vmatprep.subr.mxu0 0.0
    %456 = vmatpush1.msra.mxu0 0.0
    %457 = vmatprep.subr.mxu0 0.0
    %458 = vmatpush1.msra.mxu0 0.0
    %459 = vmatprep.subr.mxu0 0.0
    %460 = vmatpush1.msra.mxu0 0.0
    %461 = vmatprep.subr.mxu0 0.0
    %462 = vmatpush1.msra.mxu0 0.0
    %463 = vmatprep.subr.mxu0 0.0
    %464 = vmatpush1.msra.mxu0 0.0
    %465 = vmatprep.subr.mxu0 0.0
    %466 = vmatpush1.msra.mxu0 0.0
    %467 = vmatprep.subr.mxu0 0.0
    %468 = vmatpush1.msra.mxu0 0.0
    %469 = vmatprep.subr.mxu0 0.0
    %470 = vmatpush1.msra.mxu0 0.0
    %471 = vmatprep.subr.mxu0 0.0
    %472 = vmatpush1.msra.mxu0 0.0
    %473 = vmatprep.subr.mxu0 0.0
    %474 = vmatpush1.msra.mxu0 0.0
    %475 = vmatprep.subr.mxu0 0.0
    %476 = vmatpush1.msra.mxu0 0.0
    %477 = vmatprep.subr.mxu0 0.0
    %478 = vmatpush1.msra.mxu0 0.0
    %479 = vmatprep.subr.mxu0 0.0
    %480 = vmatpush1.msra.mxu0 0.0
    %481 = vmatprep.subr.mxu0 0.0
    %482 = vmatpush1.msra.mxu0 0.0
    %483 = vmatprep.subr.mxu0 0.0
    %484 = vmatpush1.msra.mxu0 0.0
    %485 = vmatprep.mubr.f32.mxu0 0.0
    %486 = vmatmul.mubr.f32.gmra.mrb[0].mxu0 %v420
    %v487 = vpop.f32.mrb[0].mxu0
    %v488 = vadd.f32 0.0, %v487
    %v489 = vpop.f32.mrb[0].mxu0
    %490 = vdwg.mxu0
    %v491 = vmul.f32 %v488, 30.0
    %492 = vst [vmem:[#allocation5] sm:$0x3] %v491
    // Predicated region
    $region14: #{memeclip_forward.1} parent=1 // pred_check
      _
    $region15: #{memeclip_forward.1} parent=1 // pred_check_branch
      %494 = sbr.rel (0) target = $region17
    $region16: #{memeclip_forward.1} parent=1 // pred_region
      %s496 = ssub.s32 32, 32
      %497 = vsyncadd [#allocation4], %s496
      %s499 = sshll.u32 [#allocation5], 4
      %s500 = int_to_ptr.vmem [resolvable:$true] %s499
      %502 = dma.vmem_to_hbm [thread:$0]  %s500, 32, %s2, [#allocation4]
    $region17: #{memeclip_forward.1} parent=1 // pred_fallthru
      _
    // Predicated region
    $region18: #{memeclip_forward.1} parent=1 // pred_check
      _
    $region19: #{memeclip_forward.1} parent=1 // pred_check_branch
      %504 = sbr.rel (0) target = $region21
    $region20: #{memeclip_forward.1} parent=1 // pred_region
      %505 = dma.done [#allocation4], 32
    $region21: #{memeclip_forward.1} parent=1 // pred_fallthru
      _
    %506 = vsyncpa [#allocation3], 1
    %507 = vsyncpa [#allocation4], 1

</llo_original>
